<compile_context>
chip_gen: v5e
topology: v5e:2x2
jax: 0.10.0
libtpu: 0.0.40
codegen_flags: <defaults>
</compile_context>

<pallas_src>
import functools

import jax
import jax.numpy as jnp
from jax.experimental import pallas as pl
from jax.experimental.pallas import tpu as pltpu

LANE = 128      # vreg lane width
SUBLANE = 8     # f32 sublane count


def _round_up(x, m):
    return (x + m - 1) // m * m


def _apply_activation(y, act):
    if act == "relu":
        return jnp.maximum(y, 0.0)
    elif act == "tanh":
        return jnp.tanh(y)
    elif act == "gelu":
        # TODO(synk): PyTorch nn.GELU defaults to exact erf-GELU; tanh approx
        # used here (difference ~1e-3) to stay on known-supported Pallas ops.
        return jax.nn.gelu(y, approximate=True)
    elif act == "none":
        return y
    raise ValueError(f"unknown activation: {act}")


# ----------------------------------------------------------------------------
# Fused Pallas kernel: whole MLP, one batch tile per grid step.
#   x_ref: (TILE_B, P) f32        padded input tile
#   w_ref: (L, P, P)   bf16       padded, stacked weights (x @ W layout)
#   b_ref: (L, 1, P)   f32        padded, stacked biases
#   o_ref: (TILE_B, P) f32        padded output tile
# Zero-padding is self-consistent: padded lanes stay exactly 0 through every
# layer (relu/tanh/gelu(0) == 0 and padded weight rows/cols are 0).
# ----------------------------------------------------------------------------
def _fused_mlp_kernel(x_ref, w_ref, b_ref, o_ref, *, activations, compute_dtype):
    h = x_ref[...]                                   # (TILE_B, P) f32, lives in vregs
    for l, act in enumerate(activations):            # unrolled at trace time
        w = w_ref[l]                                 # (P, P) bf16
        b = b_ref[l]                                 # (1, P) f32
        y = jnp.dot(h.astype(compute_dtype), w,
                    preferred_element_type=jnp.float32) + b
        # Dropout layer between hidden blocks is identity at inference time.
        h = _apply_activation(y, act)
    o_ref[...] = h.astype(o_ref.dtype)


# ----------------------------------------------------------------------------
# One-time parameter preprocessing: pad every layer to (P, P) / (1, P) and
# stack, casting weights to the MXU compute dtype.
# ----------------------------------------------------------------------------
def prepare_params(params, compute_dtype=jnp.bfloat16):
    dims = [params[0][0].shape[0]] + [w.shape[1] for (w, _) in params]
    pad_dim = _round_up(max(dims), LANE)
    num_layers = len(params)

    w_stack = jnp.zeros((num_layers, pad_dim, pad_dim), compute_dtype)
    b_stack = jnp.zeros((num_layers, 1, pad_dim), jnp.float32)
    for l, (w, b) in enumerate(params):
        d_in, d_out = w.shape
        w_stack = w_stack.at[l, :d_in, :d_out].set(w.astype(compute_dtype))
        b_stack = b_stack.at[l, 0, :d_out].set(b.astype(jnp.float32))
    return w_stack, b_stack


# ----------------------------------------------------------------------------
# Forward pass: one pallas_call for the whole network.
# ----------------------------------------------------------------------------
@functools.partial(jax.jit, static_argnames=("activations", "num_classes"))
def mlp_forward(x, w_stack, b_stack, *, activations, num_classes):
    batch, d_in = x.shape
    num_layers, pad_dim, _ = w_stack.shape
    assert len(activations) == num_layers

    tile_b = min(_round_up(batch, SUBLANE), 128)
    padded_b = _round_up(batch, tile_b)

    x_pad = jnp.zeros((padded_b, pad_dim), jnp.float32)
    x_pad = x_pad.at[:batch, :d_in].set(x.astype(jnp.float32))

    kernel = functools.partial(
        _fused_mlp_kernel,
        activations=activations,
        compute_dtype=w_stack.dtype,
    )

    out = pl.pallas_call(
        kernel,
        out_shape=jax.ShapeDtypeStruct((padded_b, pad_dim), jnp.float32),
        grid=(padded_b // tile_b,),
        in_specs=[
            pl.BlockSpec((tile_b, pad_dim), lambda i: (i, 0)),
            pl.BlockSpec((num_layers, pad_dim, pad_dim), lambda i: (0, 0, 0)),
            pl.BlockSpec((num_layers, 1, pad_dim), lambda i: (0, 0, 0)),
        ],
        out_specs=pl.BlockSpec((tile_b, pad_dim), lambda i: (i, 0)),
        compiler_params=pltpu.CompilerParams(
            dimension_semantics=("parallel",),
        ),
    )(x_pad, w_stack, b_stack)

    return out[:batch, :num_classes]


# ----------------------------------------------------------------------------
# Parameter init (same shapes as nn.Linear, stored transposed: (d_in, d_out))
# ----------------------------------------------------------------------------
def init_params(key, hidden_size, num_classes, no_layers):
    layer_dims = [(hidden_size[i], hidden_size[i + 1]) for i in range(no_layers)]
    layer_dims.append((hidden_size[no_layers], num_classes))
    params = []
    for d_in, d_out in layer_dims:
        key, kw, kb = jax.random.split(key, 3)
        bound = 1.0 / (d_in ** 0.5)
        w = jax.random.uniform(kw, (d_in, d_out), jnp.float32, -bound, bound)
        b = jax.random.uniform(kb, (d_out,), jnp.float32, -bound, bound)
        params.append((w, b))
    return params


# ----------------------------------------------------------------------------
# Pure-JAX reference mirroring the kernel's numerics (bf16 MXU, f32 accum).
# ----------------------------------------------------------------------------
def reference_forward(x, params, activations, compute_dtype=jnp.bfloat16):
    h = x.astype(jnp.float32)
    for (w, b), act in zip(params, activations):
        y = jnp.dot(h.astype(compute_dtype), w.astype(compute_dtype),
                    preferred_element_type=jnp.float32) + b.astype(jnp.float32)
        h = _apply_activation(y, act)
    return h


if __name__ == "__main__":
    # Small configuration consistent with the module's __init__:
    #   hidden_size: list of widths (len = no_layers + 1), hidden_size[0] = input dim
    #   activation_f: one activation per hidden layer; drop_layer: Dropout (identity)
    no_layers = 3
    hidden_size = [32, 64, 48, 32]
    num_classes = 10
    hidden_activations = ("relu", "tanh", "gelu")
    activations = hidden_activations + ("none",)   # final classifier Linear
    batch = 8

    key = jax.random.PRNGKey(0)
    key, kx = jax.random.split(key)
    x = jax.random.normal(kx, (batch, hidden_size[0]), jnp.float32)

    params = init_params(key, hidden_size, num_classes, no_layers)
    w_stack, b_stack = prepare_params(params)      # one-time pad + cast + stack

    out = mlp_forward(x, w_stack, b_stack,
                      activations=activations, num_classes=num_classes)
    out = jax.block_until_ready(out)

    ref = reference_forward(x, params, activations)
    assert out.shape == (batch, num_classes)
    assert jnp.allclose(out, ref, atol=1e-3, rtol=1e-3), "mismatch vs reference"

    print("KERNEL_OK")
</pallas_src>

<mosaic_0001>
module attributes {stable_mosaic.version = 11 : i64} {
  func.func @_fused_mlp_kernel(%arg0: i32, %arg1: memref<8x128xf32, #tpu.memory_space<vmem>>, %arg2: memref<4x128x128xbf16, #tpu.memory_space<vmem>>, %arg3: memref<4x1x128xf32, #tpu.memory_space<vmem>>, %arg4: memref<8x128xf32, #tpu.memory_space<vmem>>) attributes {dimension_semantics = [#tpu.dimension_semantics<parallel>], iteration_bounds = array<i64: 1>, scalar_prefetch = 0 : i64, scratch_operands = 0 : i64, tpu.core_type = #tpu.core_type<tc>, window_params = [{transform_indices = @transform_0, window_bounds = array<i64: 8, 128>}, {pipeline_mode = #tpu.pipeline_mode<synchronous>, transform_indices = @transform_1, window_bounds = array<i64: 4, 128, 128>}, {pipeline_mode = #tpu.pipeline_mode<synchronous>, transform_indices = @transform_2, window_bounds = array<i64: 4, 1, 128>}, {transform_indices = @transform_3, window_bounds = array<i64: 8, 128>}]} {
    %c0 = arith.constant 0 : index
    %c0_0 = arith.constant 0 : index
    %0 = vector.load %arg1[%c0, %c0_0] : memref<8x128xf32, #tpu.memory_space<vmem>>, vector<8x128xf32>
    %c0_1 = arith.constant 0 : index
    %c0_2 = arith.constant 0 : index
    %c0_3 = arith.constant 0 : index
    %1 = vector.load %arg2[%c0_1, %c0_2, %c0_3] : memref<4x128x128xbf16, #tpu.memory_space<vmem>>, vector<1x128x128xbf16>
    %2 = vector.shape_cast %1 : vector<1x128x128xbf16> to vector<128x128xbf16>
    %c0_4 = arith.constant 0 : index
    %c0_5 = arith.constant 0 : index
    %c0_6 = arith.constant 0 : index
    %3 = vector.load %arg3[%c0_4, %c0_5, %c0_6] : memref<4x1x128xf32, #tpu.memory_space<vmem>>, vector<1x1x128xf32>
    %4 = vector.shape_cast %3 : vector<1x1x128xf32> to vector<1x128xf32>
    %5 = arith.truncf %0 : vector<8x128xf32> to vector<8x128xbf16>
    %cst = arith.constant dense<0.000000e+00> : vector<8x128xf32>
    %6 = tpu.matmul %5, %2, %cst {dimension_numbers = #tpu.dot_dimension_numbers<[1], [0], [0], [1], [0, 0, 1, 1], [], []>} : vector<8x128xbf16>, vector<128x128xbf16>, vector<8x128xf32> -> vector<8x128xf32>
    %7 = vector.broadcast %4 : vector<1x128xf32> to vector<8x128xf32>
    %8 = arith.addf %6, %7 : vector<8x128xf32>
    %cst_7 = arith.constant 0.000000e+00 : f32
    %9 = vector.broadcast %cst_7 : f32 to vector<8x128xf32>
    %10 = arith.maximumf %8, %9 : vector<8x128xf32>
    %c1 = arith.constant 1 : index
    %c0_8 = arith.constant 0 : index
    %c0_9 = arith.constant 0 : index
    %11 = vector.load %arg2[%c1, %c0_8, %c0_9] : memref<4x128x128xbf16, #tpu.memory_space<vmem>>, vector<1x128x128xbf16>
    %12 = vector.shape_cast %11 : vector<1x128x128xbf16> to vector<128x128xbf16>
    %c1_10 = arith.constant 1 : index
    %c0_11 = arith.constant 0 : index
    %c0_12 = arith.constant 0 : index
    %13 = vector.load %arg3[%c1_10, %c0_11, %c0_12] : memref<4x1x128xf32, #tpu.memory_space<vmem>>, vector<1x1x128xf32>
    %14 = vector.shape_cast %13 : vector<1x1x128xf32> to vector<1x128xf32>
    %15 = arith.truncf %10 : vector<8x128xf32> to vector<8x128xbf16>
    %cst_13 = arith.constant dense<0.000000e+00> : vector<8x128xf32>
    %16 = tpu.matmul %15, %12, %cst_13 {dimension_numbers = #tpu.dot_dimension_numbers<[1], [0], [0], [1], [0, 0, 1, 1], [], []>} : vector<8x128xbf16>, vector<128x128xbf16>, vector<8x128xf32> -> vector<8x128xf32>
    %17 = vector.broadcast %14 : vector<1x128xf32> to vector<8x128xf32>
    %18 = arith.addf %16, %17 : vector<8x128xf32>
    %19 = math.tanh %18 : vector<8x128xf32>
    %c2 = arith.constant 2 : index
    %c0_14 = arith.constant 0 : index
    %c0_15 = arith.constant 0 : index
    %20 = vector.load %arg2[%c2, %c0_14, %c0_15] : memref<4x128x128xbf16, #tpu.memory_space<vmem>>, vector<1x128x128xbf16>
    %21 = vector.shape_cast %20 : vector<1x128x128xbf16> to vector<128x128xbf16>
    %c2_16 = arith.constant 2 : index
    %c0_17 = arith.constant 0 : index
    %c0_18 = arith.constant 0 : index
    %22 = vector.load %arg3[%c2_16, %c0_17, %c0_18] : memref<4x1x128xf32, #tpu.memory_space<vmem>>, vector<1x1x128xf32>
    %23 = vector.shape_cast %22 : vector<1x1x128xf32> to vector<1x128xf32>
    %24 = arith.truncf %19 : vector<8x128xf32> to vector<8x128xbf16>
    %cst_19 = arith.constant dense<0.000000e+00> : vector<8x128xf32>
    %25 = tpu.matmul %24, %21, %cst_19 {dimension_numbers = #tpu.dot_dimension_numbers<[1], [0], [0], [1], [0, 0, 1, 1], [], []>} : vector<8x128xbf16>, vector<128x128xbf16>, vector<8x128xf32> -> vector<8x128xf32>
    %26 = vector.broadcast %23 : vector<1x128xf32> to vector<8x128xf32>
    %27 = arith.addf %25, %26 : vector<8x128xf32>
    %28 = arith.mulf %27, %27 : vector<8x128xf32>
    %29 = arith.mulf %27, %28 : vector<8x128xf32>
    %cst_20 = arith.constant 4.471500e-02 : f32
    %30 = vector.broadcast %cst_20 : f32 to vector<8x128xf32>
    %31 = arith.mulf %30, %29 : vector<8x128xf32>
    %32 = arith.addf %27, %31 : vector<8x128xf32>
    %cst_21 = arith.constant 0.797884583 : f32
    %33 = vector.broadcast %cst_21 : f32 to vector<8x128xf32>
    %34 = arith.mulf %33, %32 : vector<8x128xf32>
    %35 = math.tanh %34 : vector<8x128xf32>
    %cst_22 = arith.constant 1.000000e+00 : f32
    %36 = vector.broadcast %cst_22 : f32 to vector<8x128xf32>
    %37 = arith.addf %36, %35 : vector<8x128xf32>
    %cst_23 = arith.constant 5.000000e-01 : f32
    %38 = vector.broadcast %cst_23 : f32 to vector<8x128xf32>
    %39 = arith.mulf %38, %37 : vector<8x128xf32>
    %40 = arith.mulf %27, %39 : vector<8x128xf32>
    %c3 = arith.constant 3 : index
    %c0_24 = arith.constant 0 : index
    %c0_25 = arith.constant 0 : index
    %41 = vector.load %arg2[%c3, %c0_24, %c0_25] : memref<4x128x128xbf16, #tpu.memory_space<vmem>>, vector<1x128x128xbf16>
    %42 = vector.shape_cast %41 : vector<1x128x128xbf16> to vector<128x128xbf16>
    %c3_26 = arith.constant 3 : index
    %c0_27 = arith.constant 0 : index
    %c0_28 = arith.constant 0 : index
    %43 = vector.load %arg3[%c3_26, %c0_27, %c0_28] : memref<4x1x128xf32, #tpu.memory_space<vmem>>, vector<1x1x128xf32>
    %44 = vector.shape_cast %43 : vector<1x1x128xf32> to vector<1x128xf32>
    %45 = arith.truncf %40 : vector<8x128xf32> to vector<8x128xbf16>
    %cst_29 = arith.constant dense<0.000000e+00> : vector<8x128xf32>
    %46 = tpu.matmul %45, %42, %cst_29 {dimension_numbers = #tpu.dot_dimension_numbers<[1], [0], [0], [1], [0, 0, 1, 1], [], []>} : vector<8x128xbf16>, vector<128x128xbf16>, vector<8x128xf32> -> vector<8x128xf32>
    %47 = vector.broadcast %44 : vector<1x128xf32> to vector<8x128xf32>
    %48 = arith.addf %46, %47 : vector<8x128xf32>
    %c0_30 = arith.constant 0 : index
    %c0_31 = arith.constant 0 : index
    %49 = vector.load %arg4[%c0_30, %c0_31] : memref<8x128xf32, #tpu.memory_space<vmem>>, vector<8x128xf32>
    tpu.vector_store %arg4[%c0_30, %c0_31], %48 {strides = array<i32>} : memref<8x128xf32, #tpu.memory_space<vmem>>, vector<8x128xf32>,
    return
  }
  func.func @transform_0(%arg0: i32) -> (i32, i32) {
    %c0_i32 = arith.constant 0 : i32
    %c0_i32_0 = arith.constant 0 : i32
    return %arg0, %c0_i32 : i32, i32
  }
  func.func @transform_1(%arg0: i32) -> (i32, i32, i32) {
    %c0_i32 = arith.constant 0 : i32
    %c0_i32_0 = arith.constant 0 : i32
    %c0_i32_1 = arith.constant 0 : i32
    %c0_i32_2 = arith.constant 0 : i32
    return %c0_i32, %c0_i32_0, %c0_i32_1 : i32, i32, i32
  }
  func.func @transform_2(%arg0: i32) -> (i32, i32, i32) {
    %c0_i32 = arith.constant 0 : i32
    %c0_i32_0 = arith.constant 0 : i32
    %c0_i32_1 = arith.constant 0 : i32
    %c0_i32_2 = arith.constant 0 : i32
    return %c0_i32, %c0_i32_0, %c0_i32_1 : i32, i32, i32
  }
  func.func @transform_3(%arg0: i32) -> (i32, i32) {
    %c0_i32 = arith.constant 0 : i32
    %c0_i32_0 = arith.constant 0 : i32
    return %arg0, %c0_i32 : i32, i32
  }
}

</mosaic_0001>

<llo_original>
// kernel: mlp_forward.1
$region0: #{mlp_forward.1}
  #allocation0 [shape = 'u32[]', space=smem, size = 0x4, offset = 0x4, fixed_abs, tag = 'smem constant byte address 0x4 - core index']
  #allocation1 [shape = 'u32[72,128]{1,0:T(1,128)}', space=vmem, size = 0x9000, scoped, tag = 'internal scratch']
  %s0 = inlined_call_operand.vmem [shape: f32[8,128], index: 0, kind: input, shape index: {}]
  %s1 = inlined_call_operand.hbm [shape: bf16[4,128,128], index: 1, kind: input, shape index: {}]
  %s2 = inlined_call_operand.vmem [shape: f32[4,1,128], index: 2, kind: input, shape index: {}]
  %s3 = inlined_call_operand.hbm [shape: f32[8,128], index: 3, kind: output, shape index: {}]
  %s4 = sld [smem:[#allocation0]]
  $region26: #{mlp_forward.1} parent=0
    _
  %s6 = ssub.s32 1, %s4
  %s7 = scalar_select 0, %s6, %s4
  $region1: #{mlp_forward.1} parent=0
    #allocation2 [shape = 'u8[131072]{0}', space=vmem, size = 0x20000, scoped, tag = 'input window, operand 1, single buffered']
    #allocation3 [shape = 's32[1]{0}', space=sflag, size = 0x4, scoped, tag = 'scoped memory for mlp_forward.1']
    #allocation4 [shape = 's32[1]{0}', space=sflag, size = 0x4, scoped, tag = 'scoped memory for mlp_forward.1']
    #allocation5 [shape = 'u8[4096]{0}', space=vmem, size = 0x1000, scoped, tag = 'output window, operand 0, single buffered']
    %8 = vsyncpa [#allocation3], 0
    %9 = vsyncpa [#allocation4], 0
    // Predicated region
    $region2: #{mlp_forward.1} parent=1 // pred_check
      _
    $region3: #{mlp_forward.1} parent=1 // pred_check_branch
      %11 = sbr.rel (0) target = $region5
    $region4: #{mlp_forward.1} parent=1 // pred_region
      _
    $region5: #{mlp_forward.1} parent=1 // pred_fallthru
      _
    // Predicated region
    $region6: #{mlp_forward.1} parent=1 // pred_check
      _
    $region7: #{mlp_forward.1} parent=1 // pred_check_branch
      %13 = sbr.rel (0) target = $region9
    $region8: #{mlp_forward.1} parent=1 // pred_region
      %15 = vsyncadd [#allocation3], 0
      %s16 = sshll.u32 %s1, 4
      %s17 = int_to_ptr.hbm [resolvable:$true] %s16
      %s18 = sshll.u32 [#allocation2], 4
      %s19 = int_to_ptr.vmem [resolvable:$true] %s18
      %24 = dma.hbm_to_vmem [thread:$0]  %s17, 4096, %s19, [#allocation3], 64, 64, 4
    $region9: #{mlp_forward.1} parent=1 // pred_fallthru
      _
    // Predicated region
    $region10: #{mlp_forward.1} parent=1 // pred_check
      _
    $region11: #{mlp_forward.1} parent=1 // pred_check_branch
      %26 = sbr.rel (0) target = $region13
    $region12: #{mlp_forward.1} parent=1 // pred_region
      _
    $region13: #{mlp_forward.1} parent=1 // pred_fallthru
      _
    // Predicated region
    $region14: #{mlp_forward.1} parent=1 // pred_check
      _
    $region15: #{mlp_forward.1} parent=1 // pred_check_branch
      %28 = sbr.rel (0) target = $region17
    $region16: #{mlp_forward.1} parent=1 // pred_region
      %30 = dma.done [#allocation3], 4096
    $region17: #{mlp_forward.1} parent=1 // pred_fallthru
      _
    %v31 = vld [vmem:[%s0] sm:$0xff]
    %v32 = vld [vmem:[#allocation2] sm:$0xf]
    %v33 = vld [vmem:[#allocation2 + $0x4] sm:$0xf]
    %v34 = vld [vmem:[#allocation2 + $0x8] sm:$0xf]
    %v35 = vld [vmem:[#allocation2 + $0xc] sm:$0xf]
    %v36 = vld [vmem:[#allocation2 + $0x10] sm:$0xf]
    %v37 = vld [vmem:[#allocation2 + $0x14] sm:$0xf]
    %v38 = vld [vmem:[#allocation2 + $0x18] sm:$0xf]
    %v39 = vld [vmem:[#allocation2 + $0x1c] sm:$0xf]
    %v40 = vld [vmem:[#allocation2 + $0x20] sm:$0xf]
    %v41 = vld [vmem:[#allocation2 + $0x24] sm:$0xf]
    %v42 = vld [vmem:[#allocation2 + $0x28] sm:$0xf]
    %v43 = vld [vmem:[#allocation2 + $0x2c] sm:$0xf]
    %v44 = vld [vmem:[#allocation2 + $0x30] sm:$0xf]
    %v45 = vld [vmem:[#allocation2 + $0x34] sm:$0xf]
    %v46 = vld [vmem:[#allocation2 + $0x38] sm:$0xf]
    %v47 = vld [vmem:[#allocation2 + $0x3c] sm:$0xf]
    %v48 = vld [vmem:[%s2] sm:$0x1]
    %v49 = vpack.c.bf16 %v31, %v31
    %v51 = vperm.slane %v48, 0
    %v69 = vunpack.c.l.b16 %v32
    %v70 = vunpack.c.l.b16 %v33
    %v71 = vunpack.c.l.b16 %v34
    %v72 = vunpack.c.l.b16 %v35
    %v73 = vunpack.c.l.b16 %v36
    %v74 = vunpack.c.l.b16 %v37
    %v75 = vunpack.c.l.b16 %v38
    %v76 = vunpack.c.l.b16 %v39
    %v77 = vunpack.c.l.b16 %v40
    %v78 = vunpack.c.l.b16 %v41
    %v79 = vunpack.c.l.b16 %v42
    %v80 = vunpack.c.l.b16 %v43
    %v81 = vunpack.c.l.b16 %v44
    %v82 = vunpack.c.l.b16 %v45
    %v83 = vunpack.c.l.b16 %v46
    %v84 = vunpack.c.l.b16 %v47
    %v85 = vpack.c.b16 %v70, %v69
    %v86 = vpack.c.b16 %v72, %v71
    %v87 = vpack.c.b16 %v74, %v73
    %v88 = vpack.c.b16 %v76, %v75
    %v89 = vpack.c.b16 %v78, %v77
    %v90 = vpack.c.b16 %v80, %v79
    %v91 = vpack.c.b16 %v82, %v81
    %v92 = vpack.c.b16 %v84, %v83
    %101 = vmatpush.bf16.msra.mxu0 %v92
    %102 = vmatpush.bf16.msra.mxu0 %v91
    %103 = vmatpush.bf16.msra.mxu0 %v90
    %104 = vmatpush.bf16.msra.mxu0 %v89
    %105 = vmatpush.bf16.msra.mxu0 %v88
    %106 = vmatpush.bf16.msra.mxu0 %v87
    %107 = vmatpush.bf16.msra.mxu0 %v86
    %108 = vmatpush.bf16.msra.mxu0 %v85
    %109 = vmatmul.bf16.gmra.mxu0 %v49
    %v110 = vpop.f32.mrf.mxu0
    %v111 = vadd.f32 %v51, %v110
    %v112 = vpop.f32.mrf.mxu0
    %113 = vdwg.mxu0
    %v114 = vmax.f32 %v111, 0.0
    %s115 = scalar_lea.vmem [#allocation2], 64
    %v116 = vld [vmem:[%s115] sm:$0xf]
    %v117 = vld [vmem:[%s115 + $0x4] sm:$0xf]
    %v118 = vld [vmem:[%s115 + $0x8] sm:$0xf]
    %v119 = vld [vmem:[%s115 + $0xc] sm:$0xf]
    %v120 = vld [vmem:[%s115 + $0x10] sm:$0xf]
    %v121 = vld [vmem:[%s115 + $0x14] sm:$0xf]
    %v122 = vld [vmem:[%s115 + $0x18] sm:$0xf]
    %v123 = vld [vmem:[%s115 + $0x1c] sm:$0xf]
    %v124 = vld [vmem:[%s115 + $0x20] sm:$0xf]
    %v125 = vld [vmem:[%s115 + $0x24] sm:$0xf]
    %v126 = vld [vmem:[%s115 + $0x28] sm:$0xf]
    %v127 = vld [vmem:[%s115 + $0x2c] sm:$0xf]
    %v128 = vld [vmem:[%s115 + $0x30] sm:$0xf]
    %v129 = vld [vmem:[%s115 + $0x34] sm:$0xf]
    %v130 = vld [vmem:[%s115 + $0x38] sm:$0xf]
    %v131 = vld [vmem:[%s115 + $0x3c] sm:$0xf]
    %s132 = scalar_lea.vmem %s2, 1
    %v133 = vld [vmem:[%s132] sm:$0x1]
    %v134 = vpack.c.bf16 %v114, %v114
    %v136 = vperm.slane %v133, 0
    %v154 = vunpack.c.l.b16 %v116
    %v155 = vunpack.c.l.b16 %v117
    %v156 = vunpack.c.l.b16 %v118
    %v157 = vunpack.c.l.b16 %v119
    %v158 = vunpack.c.l.b16 %v120
    %v159 = vunpack.c.l.b16 %v121
    %v160 = vunpack.c.l.b16 %v122
    %v161 = vunpack.c.l.b16 %v123
    %v162 = vunpack.c.l.b16 %v124
    %v163 = vunpack.c.l.b16 %v125
    %v164 = vunpack.c.l.b16 %v126
    %v165 = vunpack.c.l.b16 %v127
    %v166 = vunpack.c.l.b16 %v128
    %v167 = vunpack.c.l.b16 %v129
    %v168 = vunpack.c.l.b16 %v130
    %v169 = vunpack.c.l.b16 %v131
    %v170 = vpack.c.b16 %v155, %v154
    %v171 = vpack.c.b16 %v157, %v156
    %v172 = vpack.c.b16 %v159, %v158
    %v173 = vpack.c.b16 %v161, %v160
    %v174 = vpack.c.b16 %v163, %v162
    %v175 = vpack.c.b16 %v165, %v164
    %v176 = vpack.c.b16 %v167, %v166
    %v177 = vpack.c.b16 %v169, %v168
    %186 = vmatpush.bf16.msra.mxu0 %v177
    %187 = vmatpush.bf16.msra.mxu0 %v176
    %188 = vmatpush.bf16.msra.mxu0 %v175
    %189 = vmatpush.bf16.msra.mxu0 %v174
    %190 = vmatpush.bf16.msra.mxu0 %v173
    %191 = vmatpush.bf16.msra.mxu0 %v172
    %192 = vmatpush.bf16.msra.mxu0 %v171
    %193 = vmatpush.bf16.msra.mxu0 %v170
    %194 = vmatmul.bf16.gmra.mxu0 %v134
    %v195 = vpop.f32.mrf.mxu0
    %v196 = vadd.f32 %v136, %v195
    %v197 = vpop.f32.mrf.mxu0
    %198 = vdwg.mxu0
    %v199 = vtanh.pop %v196
    %s200 = scalar_lea.vmem [#allocation2], 128
    %v201 = vld [vmem:[%s200] sm:$0xf]
    %v202 = vld [vmem:[%s200 + $0x4] sm:$0xf]
    %v203 = vld [vmem:[%s200 + $0x8] sm:$0xf]
    %v204 = vld [vmem:[%s200 + $0xc] sm:$0xf]
    %v205 = vld [vmem:[%s200 + $0x10] sm:$0xf]
    %v206 = vld [vmem:[%s200 + $0x14] sm:$0xf]
    %v207 = vld [vmem:[%s200 + $0x18] sm:$0xf]
    %v208 = vld [vmem:[%s200 + $0x1c] sm:$0xf]
    %v209 = vld [vmem:[%s200 + $0x20] sm:$0xf]
    %v210 = vld [vmem:[%s200 + $0x24] sm:$0xf]
    %v211 = vld [vmem:[%s200 + $0x28] sm:$0xf]
    %v212 = vld [vmem:[%s200 + $0x2c] sm:$0xf]
    %v213 = vld [vmem:[%s200 + $0x30] sm:$0xf]
    %v214 = vld [vmem:[%s200 + $0x34] sm:$0xf]
    %v215 = vld [vmem:[%s200 + $0x38] sm:$0xf]
    %v216 = vld [vmem:[%s200 + $0x3c] sm:$0xf]
    %s217 = scalar_lea.vmem %s2, 2
    %v218 = vld [vmem:[%s217] sm:$0x1]
    %v219 = vpack.c.bf16 %v199, %v199
    %v221 = vperm.slane %v218, 0
    %v239 = vunpack.c.l.b16 %v201
    %v240 = vunpack.c.l.b16 %v202
    %v241 = vunpack.c.l.b16 %v203
    %v242 = vunpack.c.l.b16 %v204
    %v243 = vunpack.c.l.b16 %v205
    %v244 = vunpack.c.l.b16 %v206
    %v245 = vunpack.c.l.b16 %v207
    %v246 = vunpack.c.l.b16 %v208
    %v247 = vunpack.c.l.b16 %v209
    %v248 = vunpack.c.l.b16 %v210
    %v249 = vunpack.c.l.b16 %v211
    %v250 = vunpack.c.l.b16 %v212
    %v251 = vunpack.c.l.b16 %v213
    %v252 = vunpack.c.l.b16 %v214
    %v253 = vunpack.c.l.b16 %v215
    %v254 = vunpack.c.l.b16 %v216
    %v255 = vpack.c.b16 %v240, %v239
    %v256 = vpack.c.b16 %v242, %v241
    %v257 = vpack.c.b16 %v244, %v243
    %v258 = vpack.c.b16 %v246, %v245
    %v259 = vpack.c.b16 %v248, %v247
    %v260 = vpack.c.b16 %v250, %v249
    %v261 = vpack.c.b16 %v252, %v251
    %v262 = vpack.c.b16 %v254, %v253
    %271 = vmatpush.bf16.msra.mxu0 %v262
    %272 = vmatpush.bf16.msra.mxu0 %v261
    %273 = vmatpush.bf16.msra.mxu0 %v260
    %274 = vmatpush.bf16.msra.mxu0 %v259
    %275 = vmatpush.bf16.msra.mxu0 %v258
    %276 = vmatpush.bf16.msra.mxu0 %v257
    %277 = vmatpush.bf16.msra.mxu0 %v256
    %278 = vmatpush.bf16.msra.mxu0 %v255
    %279 = vmatmul.bf16.gmra.mxu0 %v219
    %v280 = vpop.f32.mrf.mxu0
    %v281 = vadd.f32 %v221, %v280
    %v282 = vpop.f32.mrf.mxu0
    %283 = vdwg.mxu0
    %v284 = vmul.f32 %v281, %v281
    %v285 = vmul.f32 %v281, %v284
    %v286 = vmul.f32 %v285, 0.044715
    %v287 = vadd.f32 %v281, %v286
    %v288 = vmul.f32 %v287, 0.7978846
    %v289 = vtanh.pop %v288
    %v290 = vadd.f32 %v289, 1.0
    %v291 = vmul.f32 %v290, 0.5
    %v292 = vmul.f32 %v281, %v291
    %s293 = scalar_lea.vmem [#allocation2], 192
    %v294 = vld [vmem:[%s293] sm:$0xf]
    %v295 = vld [vmem:[%s293 + $0x4] sm:$0xf]
    %v296 = vld [vmem:[%s293 + $0x8] sm:$0xf]
    %v297 = vld [vmem:[%s293 + $0xc] sm:$0xf]
    %v298 = vld [vmem:[%s293 + $0x10] sm:$0xf]
    %v299 = vld [vmem:[%s293 + $0x14] sm:$0xf]
    %v300 = vld [vmem:[%s293 + $0x18] sm:$0xf]
    %v301 = vld [vmem:[%s293 + $0x1c] sm:$0xf]
    %v302 = vld [vmem:[%s293 + $0x20] sm:$0xf]
    %v303 = vld [vmem:[%s293 + $0x24] sm:$0xf]
    %v304 = vld [vmem:[%s293 + $0x28] sm:$0xf]
    %v305 = vld [vmem:[%s293 + $0x2c] sm:$0xf]
    %v306 = vld [vmem:[%s293 + $0x30] sm:$0xf]
    %v307 = vld [vmem:[%s293 + $0x34] sm:$0xf]
    %v308 = vld [vmem:[%s293 + $0x38] sm:$0xf]
    %v309 = vld [vmem:[%s293 + $0x3c] sm:$0xf]
    %s310 = scalar_lea.vmem %s2, 3
    %v311 = vld [vmem:[%s310] sm:$0x1]
    %v312 = vpack.c.bf16 %v292, %v292
    %v314 = vperm.slane %v311, 0
    %v332 = vunpack.c.l.b16 %v294
    %v333 = vunpack.c.l.b16 %v295
    %v334 = vunpack.c.l.b16 %v296
    %v335 = vunpack.c.l.b16 %v297
    %v336 = vunpack.c.l.b16 %v298
    %v337 = vunpack.c.l.b16 %v299
    %v338 = vunpack.c.l.b16 %v300
    %v339 = vunpack.c.l.b16 %v301
    %v340 = vunpack.c.l.b16 %v302
    %v341 = vunpack.c.l.b16 %v303
    %v342 = vunpack.c.l.b16 %v304
    %v343 = vunpack.c.l.b16 %v305
    %v344 = vunpack.c.l.b16 %v306
    %v345 = vunpack.c.l.b16 %v307
    %v346 = vunpack.c.l.b16 %v308
    %v347 = vunpack.c.l.b16 %v309
    %v348 = vpack.c.b16 %v333, %v332
    %v349 = vpack.c.b16 %v335, %v334
    %v350 = vpack.c.b16 %v337, %v336
    %v351 = vpack.c.b16 %v339, %v338
    %v352 = vpack.c.b16 %v341, %v340
    %v353 = vpack.c.b16 %v343, %v342
    %v354 = vpack.c.b16 %v345, %v344
    %v355 = vpack.c.b16 %v347, %v346
    %364 = vmatpush.bf16.msra.mxu0 %v355
    %365 = vmatpush.bf16.msra.mxu0 %v354
    %366 = vmatpush.bf16.msra.mxu0 %v353
    %367 = vmatpush.bf16.msra.mxu0 %v352
    %368 = vmatpush.bf16.msra.mxu0 %v351
    %369 = vmatpush.bf16.msra.mxu0 %v350
    %370 = vmatpush.bf16.msra.mxu0 %v349
    %371 = vmatpush.bf16.msra.mxu0 %v348
    %372 = vmatmul.bf16.gmra.mxu0 %v312
    %v373 = vpop.f32.mrf.mxu0
    %v374 = vadd.f32 %v314, %v373
    %v375 = vpop.f32.mrf.mxu0
    %376 = vdwg.mxu0
    %377 = vst [vmem:[#allocation5] sm:$0xff] %v374
    // Predicated region
    $region18: #{mlp_forward.1} parent=1 // pred_check
      _
    $region19: #{mlp_forward.1} parent=1 // pred_check_branch
      %379 = sbr.rel (0) target = $region21
    $region20: #{mlp_forward.1} parent=1 // pred_region
      %381 = vsyncadd [#allocation4], 0
      %s383 = sshll.u32 [#allocation5], 4
      %s384 = int_to_ptr.vmem [resolvable:$true] %s383
      %s385 = sshll.u32 %s3, 4
      %s386 = int_to_ptr.hbm [resolvable:$true] %s385
      %388 = dma.vmem_to_hbm [thread:$0]  %s384, 128, %s386, [#allocation4]
    $region21: #{mlp_forward.1} parent=1 // pred_fallthru
      _
    // Predicated region
    $region22: #{mlp_forward.1} parent=1 // pred_check
      _
    $region23: #{mlp_forward.1} parent=1 // pred_check_branch
      %390 = sbr.rel (0) target = $region25
    $region24: #{mlp_forward.1} parent=1 // pred_region
      %392 = dma.done [#allocation4], 128
    $region25: #{mlp_forward.1} parent=1 // pred_fallthru
      _
    %393 = vsyncpa [#allocation3], 1
    %394 = vsyncpa [#allocation4], 1

</llo_original>
